<compile_context>
chip_gen: v6e
topology: v6e:2x2x1
jax: 0.10.0
libtpu: 0.0.40
codegen_flags: <defaults>
</compile_context>

<pallas_src>
import functools

import jax
import jax.numpy as jnp
from jax.experimental import pallas as pl
from jax.experimental.pallas import tpu as pltpu


def _round_up(x, m):
    return ((x + m - 1) // m) * m


def _sublane_multiple(dtype):
    size = jnp.dtype(dtype).itemsize
    if size >= 4:
        return 8
    if size == 2:
        return 16
    return 32


def _vmem_capacity_bytes():
    try:
        return int(pltpu.get_tpu_info().vmem_capacity_bytes)
    except Exception:
        return 64 << 20  # conservative fallback: v7x per-TC VMEM


def _block_spec(shape, index_map, *, buffers=None):
    """BlockSpec with optional explicit buffer count (falls back cleanly)."""
    if buffers is not None and hasattr(pl, "Buffered"):
        try:
            return pl.BlockSpec(shape, index_map,
                                pipeline_mode=pl.Buffered(buffers))
        except TypeError:
            pass
    return pl.BlockSpec(shape, index_map)


def _vmem_need(tile_b, tile_c, E, x_bytes, w_bytes, o_bytes, nbuf_w):
    return (2 * tile_b * E * x_bytes           # fea tile (double-buffered)
            + nbuf_w * E * tile_c * w_bytes    # weight tile
            + nbuf_w * tile_c * 4              # bias tile (f32)
            + 2 * tile_b * tile_c * o_bytes    # output tile (double-buffered)
            + tile_b * E * w_bytes)            # xn scratch (MXU dtype)


def binary_head_kernel(x_ref, w_ref, b_ref, o_ref, xn_ref, *, s, eps):
    # x_ref: (TB, E); w_ref: (E, TC) in MXU dtype; b_ref: (1, TC) = bias*s;
    # o_ref: (TB, TC); xn_ref: (TB, E) VMEM scratch in MXU dtype.

    # Row-wise L2 normalization (scale s folded into 1/||x||) is computed only
    # for the first class tile of each batch tile and cached for j > 0.
    @pl.when(pl.program_id(1) == 0)
    def _():
        x = x_ref[...].astype(jnp.float32)
        sq_sum = jnp.sum(x * x, axis=-1, keepdims=True)             # (TB, 1)
        inv_norm_s = jax.lax.rsqrt(jnp.maximum(sq_sum, eps)) * s    # s / ||x||
        xn_ref[...] = (x * inv_norm_s).astype(xn_ref.dtype)

    # Linear on the MXU (bf16 operands, f32 accumulate), then (bias * s).
    logits = jnp.dot(xn_ref[...], w_ref[...],
                     preferred_element_type=jnp.float32)
    o_ref[...] = (logits + b_ref[...].astype(jnp.float32)).astype(o_ref.dtype)


def binary_head(fea, weight_t, bias, s=64.0, *, tile_b=None, tile_c=None,
                out_dtype=None, mxu_dtype=jnp.bfloat16, eps=1e-12):
    """fea: (B, E); weight_t: (E, C) (PyTorch weight transposed); bias: (C,).

    Returns logits of shape (B, C) = (l2_norm(fea) @ weight_t + bias) * s.
    """
    B, E = fea.shape
    E2, C = weight_t.shape
    assert E == E2, "embedding dims must match"
    if out_dtype is None:
        out_dtype = fea.dtype

    x_bytes = jnp.dtype(fea.dtype).itemsize
    w_bytes = jnp.dtype(mxu_dtype).itemsize
    o_bytes = jnp.dtype(out_dtype).itemsize

    sub = max(_sublane_multiple(fea.dtype), _sublane_multiple(mxu_dtype))

    vmem_cap = _vmem_capacity_bytes()
    vmem_budget = (vmem_cap * 3) // 4   # tiles must fit under this

    # ---- batch tile: up to 512 rows (fewer grid steps / weight re-fetches),
    # rounded to the dtype-dependent sublane multiple ------------------------
    if tile_b is None:
        tile_b = min(512, _round_up(B, sub))
    tile_b = max(sub, _round_up(tile_b, sub))

    # ---- class tile: full (128-padded) class dim when it fits the VMEM
    # budget; otherwise shrink in 128 multiples, then shrink tile_b ----------
    cp_min = _round_up(max(C, 1), 128)
    if tile_c is None:
        tile_c = cp_min
        while tile_c > 128:
            nbuf = 1 if tile_c == cp_min else 2
            if _vmem_need(tile_b, tile_c, E, x_bytes, w_bytes, o_bytes,
                          nbuf) <= vmem_budget:
                break
            tile_c = max(128, _round_up(tile_c // 2, 128))
    else:
        tile_c = max(128, _round_up(tile_c, 128))

    Cp = _round_up(max(C, 1), tile_c)
    gj = Cp // tile_c
    nbuf_w = 1 if gj == 1 else 2   # grid-invariant weight -> single buffer

    while (_vmem_need(tile_b, tile_c, E, x_bytes, w_bytes, o_bytes, nbuf_w)
           > vmem_budget) and tile_b > sub:
        tile_b = max(sub, _round_up(tile_b // 2, sub))

    Bp = _round_up(B, tile_b)
    grid = (Bp // tile_b, gj)

    # ---- host-side padding / dtype prep -------------------------------------
    # Note: when C is not a multiple of 128 this materializes a padded copy of
    # the weight; acceptable here (small heads), avoidable with a masked tail
    # tile if it ever dominates.
    fea_p = fea if Bp == B else jnp.pad(fea, ((0, Bp - B), (0, 0)))
    w_p = weight_t.astype(mxu_dtype)
    if Cp != C:
        w_p = jnp.pad(w_p, ((0, 0), (0, Cp - C)))
    b_p = bias if Cp == C else jnp.pad(bias, (0, Cp - C))
    bias2d = (b_p.astype(jnp.float32) * s).reshape(1, Cp)  # fold s into bias

    # ---- VMEM limit derived from the actual tile footprint ------------------
    need = _vmem_need(tile_b, tile_c, E, x_bytes, w_bytes, o_bytes, nbuf_w)
    vmem_limit = int(min(vmem_cap - (2 << 20), max(need * 5 // 4, 32 << 20)))
    vmem_limit = max(vmem_limit, need + (1 << 20))

    wbuf = 1 if gj == 1 else None   # single-buffer never-changing blocks

    kernel = functools.partial(binary_head_kernel, s=float(s), eps=float(eps))

    out = pl.pallas_call(
        kernel,
        out_shape=jax.ShapeDtypeStruct((Bp, Cp), out_dtype),
        grid_spec=pltpu.PrefetchScalarGridSpec(
            num_scalar_prefetch=0,
            grid=grid,
            in_specs=[
                pl.BlockSpec((tile_b, E), lambda i, j: (i, 0)),          # fea
                _block_spec((E, tile_c), lambda i, j: (0, j), buffers=wbuf),  # W
                _block_spec((1, tile_c), lambda i, j: (0, j), buffers=wbuf),  # b*s
            ],
            out_specs=pl.BlockSpec((tile_b, tile_c), lambda i, j: (i, j)),
            scratch_shapes=[pltpu.VMEM((tile_b, E), mxu_dtype)],         # xn
        ),
        compiler_params=pltpu.CompilerParams(
            dimension_semantics=("parallel", "arbitrary"),
            vmem_limit_bytes=vmem_limit,
        ),
    )(fea_p, w_p, bias2d)

    if Bp != B or Cp != C:
        out = out[:B, :C]
    return out


if __name__ == "__main__":
    # Small shapes consistent with the module (emb_size -> num_class linear).
    # C is deliberately not a multiple of 128 to exercise the lane padding.
    B, E, C = 16, 128, 200
    s = 64.0

    key = jax.random.PRNGKey(0)
    k_x, k_w, k_b = jax.random.split(key, 3)

    fea = jax.random.normal(k_x, (B, E), dtype=jnp.float32)
    # PyTorch stores the Linear weight as (C, E); we pass it transposed.
    w = jax.random.normal(k_w, (C, E), dtype=jnp.float32) * 0.02
    b = jax.random.normal(k_b, (C,), dtype=jnp.float32) * 0.01

    weight_t = w.T  # (E, C)

    out = binary_head(fea, weight_t, b, s=s)
    out = jax.block_until_ready(out)

    # Reference in plain JAX (same math as the PyTorch forward, f32).
    fea_n = fea / jnp.linalg.norm(fea, axis=1, keepdims=True)
    ref = (fea_n @ weight_t + b) * s

    assert out.shape == (B, C)
    # Tolerance accounts for the bf16 MXU operands (f32 accumulation).
    assert jnp.allclose(out, ref, atol=3e-2, rtol=3e-2), (
        float(jnp.max(jnp.abs(out - ref))))

    print("KERNEL_OK")
</pallas_src>

<mosaic_0001>
module attributes {stable_mosaic.version = 11 : i64} {
  func.func @binary_head_kernel(%arg0: i32, %arg1: i32, %arg2: memref<16x128xf32, #tpu.memory_space<vmem>>, %arg3: memref<128x256xbf16, #tpu.memory_space<vmem>>, %arg4: memref<1x256xf32, #tpu.memory_space<vmem>>, %arg5: memref<16x256xf32, #tpu.memory_space<vmem>>, %arg6: memref<16x128xbf16, #tpu.memory_space<vmem>>) attributes {dimension_semantics = [#tpu.dimension_semantics<parallel>, #tpu.dimension_semantics<arbitrary>], iteration_bounds = array<i64: 1, 1>, scalar_prefetch = 0 : i64, scratch_operands = 1 : i64, tpu.core_type = #tpu.core_type<tc>, window_params = [{transform_indices = @transform_0, window_bounds = array<i64: 16, 128>}, {pipeline_mode = #tpu.pipeline_mode<synchronous>, transform_indices = @transform_1, window_bounds = array<i64: 128, 256>}, {pipeline_mode = #tpu.pipeline_mode<synchronous>, transform_indices = @transform_2, window_bounds = array<i64: 1, 256>}, {transform_indices = @transform_3, window_bounds = array<i64: 16, 256>}]} {
    %c0_i32 = arith.constant 0 : i32
    %0 = arith.cmpi eq, %arg1, %c0_i32 : i32
    %1 = arith.extui %0 : i1 to i32
    %c0_i32_0 = arith.constant 0 : i32
    %2 = arith.cmpi ne, %1, %c0_i32_0 : i32
    scf.if %2 {
      %c0_8 = arith.constant 0 : index
      %c0_9 = arith.constant 0 : index
      %10 = vector.load %arg2[%c0_8, %c0_9] : memref<16x128xf32, #tpu.memory_space<vmem>>, vector<16x128xf32>
      %11 = arith.mulf %10, %10 : vector<16x128xf32>
      %cst_10 = arith.constant dense<0.000000e+00> : vector<16xf32>
      %12 = vector.multi_reduction <add>, %11, %cst_10 [1] : vector<16x128xf32> to vector<16xf32>
      %13 = vector.shape_cast %12 : vector<16xf32> to vector<16x1xf32>
      %cst_11 = arith.constant 9.99999996E-13 : f32
      %14 = vector.broadcast %cst_11 : f32 to vector<16x1xf32>
      %15 = arith.maximumf %13, %14 : vector<16x1xf32>
      %16 = math.rsqrt %15 : vector<16x1xf32>
      %cst_12 = arith.constant 6.400000e+01 : f32
      %17 = vector.broadcast %cst_12 : f32 to vector<16x1xf32>
      %18 = arith.mulf %16, %17 : vector<16x1xf32>
      %19 = vector.broadcast %18 : vector<16x1xf32> to vector<16x128xf32>
      %20 = arith.mulf %10, %19 : vector<16x128xf32>
      %21 = arith.truncf %20 : vector<16x128xf32> to vector<16x128xbf16>
      %c0_13 = arith.constant 0 : index
      %c0_14 = arith.constant 0 : index
      %22 = vector.load %arg6[%c0_13, %c0_14] : memref<16x128xbf16, #tpu.memory_space<vmem>>, vector<16x128xbf16>
      tpu.vector_store %arg6[%c0_13, %c0_14], %21 {strides = array<i32>} : memref<16x128xbf16, #tpu.memory_space<vmem>>, vector<16x128xbf16>,
    } else {
    }
    %c0 = arith.constant 0 : index
    %c0_1 = arith.constant 0 : index
    %3 = vector.load %arg6[%c0, %c0_1] : memref<16x128xbf16, #tpu.memory_space<vmem>>, vector<16x128xbf16>
    %c0_2 = arith.constant 0 : index
    %c0_3 = arith.constant 0 : index
    %4 = vector.load %arg3[%c0_2, %c0_3] : memref<128x256xbf16, #tpu.memory_space<vmem>>, vector<128x256xbf16>
    %cst = arith.constant dense<0.000000e+00> : vector<16x256xf32>
    %5 = tpu.matmul %3, %4, %cst {dimension_numbers = #tpu.dot_dimension_numbers<[1], [0], [0], [1], [0, 0, 1, 1], [], []>} : vector<16x128xbf16>, vector<128x256xbf16>, vector<16x256xf32> -> vector<16x256xf32>
    %c0_4 = arith.constant 0 : index
    %c0_5 = arith.constant 0 : index
    %6 = vector.load %arg4[%c0_4, %c0_5] : memref<1x256xf32, #tpu.memory_space<vmem>>, vector<1x256xf32>
    %7 = vector.broadcast %6 : vector<1x256xf32> to vector<16x256xf32>
    %8 = arith.addf %5, %7 : vector<16x256xf32>
    %c0_6 = arith.constant 0 : index
    %c0_7 = arith.constant 0 : index
    %9 = vector.load %arg5[%c0_6, %c0_7] : memref<16x256xf32, #tpu.memory_space<vmem>>, vector<16x256xf32>
    tpu.vector_store %arg5[%c0_6, %c0_7], %8 {strides = array<i32>} : memref<16x256xf32, #tpu.memory_space<vmem>>, vector<16x256xf32>,
    return
  }
  func.func @transform_0(%arg0: i32, %arg1: i32) -> (i32, i32) {
    %c0_i32 = arith.constant 0 : i32
    %c0_i32_0 = arith.constant 0 : i32
    return %arg0, %c0_i32 : i32, i32
  }
  func.func @transform_1(%arg0: i32, %arg1: i32) -> (i32, i32) {
    %c0_i32 = arith.constant 0 : i32
    %c0_i32_0 = arith.constant 0 : i32
    return %c0_i32, %arg1 : i32, i32
  }
  func.func @transform_2(%arg0: i32, %arg1: i32) -> (i32, i32) {
    %c0_i32 = arith.constant 0 : i32
    %c0_i32_0 = arith.constant 0 : i32
    return %c0_i32, %arg1 : i32, i32
  }
  func.func @transform_3(%arg0: i32, %arg1: i32) -> (i32, i32) {
    %c0_i32 = arith.constant 0 : i32
    return %arg0, %arg1 : i32, i32
  }
}

</mosaic_0001>

<llo_original>
// kernel: tpu_custom_call.1
$region0: #{tpu_custom_call.1}
  #allocation0 [shape = 'u32[]', space=smem, size = 0x4, offset = 0x4, fixed_abs, tag = 'smem constant byte address 0x4 - core index']
  #allocation1 [shape = 'u32[144,128]{1,0:T(1,128)}', space=vmem, size = 0x12000, scoped, tag = 'internal scratch']
  #allocation2 [shape = 'bf16[16,128]{1,0:T(8,128)(2,1)}', space=vmem, size = 0x1000, scoped, tag = 'scratch operand']
  %s0 = inlined_call_operand.hbm [shape: f32[16,128], index: 0, kind: input, shape index: {}]
  %s1 = inlined_call_operand.hbm [shape: bf16[128,256], index: 1, kind: input, shape index: {}]
  %s2 = inlined_call_operand.vmem [shape: f32[1,256], index: 2, kind: input, shape index: {}]
  %s3 = inlined_call_operand.hbm [shape: f32[16,256], index: 3, kind: output, shape index: {}]
  %s4 = sld [smem:[#allocation0]]
  $region34: #{tpu_custom_call.1} parent=0
    _
  %s6 = ssub.s32 1, %s4
  %s7 = scalar_select 0, %s6, %s4
  $region1: #{tpu_custom_call.1} parent=0
    #allocation3 [shape = 'u8[8192]{0}', space=vmem, size = 0x2000, scoped, tag = 'input window, operand 0, single buffered']
    #allocation4 [shape = 's32[1]{0}', space=sflag, size = 0x4, scoped, tag = 'scoped memory for tpu_custom_call.1']
    #allocation5 [shape = 's32[1]{0}', space=sflag, size = 0x4, scoped, tag = 'scoped memory for tpu_custom_call.1']
    #allocation6 [shape = 'u8[65536]{0}', space=vmem, size = 0x10000, scoped, tag = 'input window, operand 1, single buffered']
    #allocation7 [shape = 's32[1]{0}', space=sflag, size = 0x4, scoped, tag = 'scoped memory for tpu_custom_call.1']
    #allocation8 [shape = 'u8[16384]{0}', space=vmem, size = 0x4000, scoped, tag = 'output window, operand 0, single buffered']
    %8 = vsyncpa [#allocation4], 0
    %9 = vsyncpa [#allocation7], 0
    %10 = vsyncpa [#allocation5], 0
    // Predicated region
    $region2: #{tpu_custom_call.1} parent=1 // pred_check
      _
    $region3: #{tpu_custom_call.1} parent=1 // pred_check_branch
      %12 = sbr.rel (0) target = $region5
    $region4: #{tpu_custom_call.1} parent=1 // pred_region
      %s14 = ssub.s32 256, 256
      %15 = vsyncadd [#allocation4], %s14
      %s16 = sshll.u32 [#allocation3], 4
      %s17 = int_to_ptr.vmem [resolvable:$true] %s16
      %22 = dma.hbm_to_vmem [thread:$0]  %s0, 256, %s17, [#allocation4], 128, 128, 8
    $region5: #{tpu_custom_call.1} parent=1 // pred_fallthru
      _
    // Predicated region
    $region6: #{tpu_custom_call.1} parent=1 // pred_check
      _
    $region7: #{tpu_custom_call.1} parent=1 // pred_check_branch
      %24 = sbr.rel (0) target = $region9
    $region8: #{tpu_custom_call.1} parent=1 // pred_region
      %s26 = ssub.s32 2048, 2048
      %27 = vsyncadd [#allocation7], %s26
      %s28 = sshll.u32 [#allocation6], 4
      %s29 = int_to_ptr.vmem [resolvable:$true] %s28
      %34 = dma.hbm_to_vmem [thread:$0]  %s1, 2048, %s29, [#allocation7], 128, 128, 8
    $region9: #{tpu_custom_call.1} parent=1 // pred_fallthru
      _
    // Predicated region
    $region10: #{tpu_custom_call.1} parent=1 // pred_check
      _
    $region11: #{tpu_custom_call.1} parent=1 // pred_check_branch
      %36 = sbr.rel (0) target = $region13
    $region12: #{tpu_custom_call.1} parent=1 // pred_region
      _
    $region13: #{tpu_custom_call.1} parent=1 // pred_fallthru
      _
    // Predicated region
    $region14: #{tpu_custom_call.1} parent=1 // pred_check
      _
    $region15: #{tpu_custom_call.1} parent=1 // pred_check_branch
      %38 = sbr.rel (0) target = $region17
    $region16: #{tpu_custom_call.1} parent=1 // pred_region
      %39 = dma.done [#allocation4], 256
    $region17: #{tpu_custom_call.1} parent=1 // pred_fallthru
      _
    // Predicated region
    $region18: #{tpu_custom_call.1} parent=1 // pred_check
      _
    $region19: #{tpu_custom_call.1} parent=1 // pred_check_branch
      %41 = sbr.rel (0) target = $region21
    $region20: #{tpu_custom_call.1} parent=1 // pred_region
      %42 = dma.done [#allocation7], 2048
    $region21: #{tpu_custom_call.1} parent=1 // pred_fallthru
      _
    %p44 = scmp.eq.s32.totalorder 0, 0
    // Predicated region
    $region22: #{tpu_custom_call.1} parent=1 // pred_check
      %p45 = pneg %p44
    $region23: #{tpu_custom_call.1} parent=1 // pred_check_branch
      %47 = sbr.rel (%p45) target = $region25
    $region24: #{tpu_custom_call.1} parent=1 // pred_region
      %v48 = vld [vmem:[#allocation3] sm:$0xff]
      %v49 = vld [vmem:[#allocation3 + $0x8] sm:$0xff]
      %v50 = vmul.f32 %v48, %v48
      %v51 = vmul.f32 %v49, %v49
      %52 = vadd.xlane.f32.xlu0 %v50
      %v53 = vpop.xlane.xlu0 %52
      %54 = vadd.xlane.f32.xlu0 %v51
      %v55 = vpop.xlane.xlu0 %54
      %v56 = vmax.f32 %v53, 1e-12
      %v57 = vmax.f32 %v55, 1e-12
      %v58 = vrsqrt.pop %v56
      %v59 = vrsqrt.pop %v57
      %v60 = vmul.f32 %v58, 64.0
      %v61 = vmul.f32 %v59, 64.0
      %v62 = vmul.f32 %v48, %v60
      %v63 = vmul.f32 %v49, %v61
      %v64 = vpack.c.bf16 %v63, %v62
      %v66 = vunpack.c.l.b16 %v64
      %v67 = vunpack.c.h.b16 %v64
      %v68 = vpack.c.b16 %v66, %v66
      %v69 = vpack.c.b16 %v67, %v67
      %72 = vst [vmem:[#allocation2] sm:$0xf] %v68
      %73 = vst [vmem:[#allocation2 + $0x4] sm:$0xf] %v69
    $region25: #{tpu_custom_call.1} parent=1 // pred_fallthru
      _
    %v74 = vld [vmem:[#allocation2] sm:$0xf]
    %v75 = vld [vmem:[#allocation2 + $0x4] sm:$0xf]
    %v76 = vld [vmem:[#allocation6] sm:$0xff]
    %v77 = vld [vmem:[#allocation6 + $0x8] sm:$0xff]
    %v78 = vld [vmem:[#allocation6 + $0x10] sm:$0xff]
    %v79 = vld [vmem:[#allocation6 + $0x18] sm:$0xff]
    %v80 = vld [vmem:[#allocation6 + $0x20] sm:$0xff]
    %v81 = vld [vmem:[#allocation6 + $0x28] sm:$0xff]
    %v82 = vld [vmem:[#allocation6 + $0x30] sm:$0xff]
    %v83 = vld [vmem:[#allocation6 + $0x38] sm:$0xff]
    %v84 = vld [vmem:[#allocation6 + $0x40] sm:$0xff]
    %v85 = vld [vmem:[#allocation6 + $0x48] sm:$0xff]
    %v86 = vld [vmem:[#allocation6 + $0x50] sm:$0xff]
    %v87 = vld [vmem:[#allocation6 + $0x58] sm:$0xff]
    %v88 = vld [vmem:[#allocation6 + $0x60] sm:$0xff]
    %v89 = vld [vmem:[#allocation6 + $0x68] sm:$0xff]
    %v90 = vld [vmem:[#allocation6 + $0x70] sm:$0xff]
    %v91 = vld [vmem:[#allocation6 + $0x78] sm:$0xff]
    %v92 = vld [vmem:[%s2] sm:$0x3]
    %v94 = vlaneseq
    %v95 = vshrl.u32 %v94, 7
    %v96 = vsub.s32 0, %v95
    %v97 = vrot.slane %v92, %v96
    %v98 = vlaneseq
    %v99 = vshrl.u32 %v98, 7
    %v100 = vsub.s32 1, %v99
    %v101 = vrot.slane %v92, %v100
    %v106 = vunpack.c.l.b16 %v74
    %v107 = vunpack.c.l.b16 %v75
    %v108 = vpack.c.b16 %v107, %v106
    %v126 = vunpack.c.l.b16 %v76
    %v127 = vunpack.c.h.b16 %v76
    %v128 = vunpack.c.l.b16 %v77
    %v129 = vunpack.c.h.b16 %v77
    %v130 = vunpack.c.l.b16 %v78
    %v131 = vunpack.c.h.b16 %v78
    %v132 = vunpack.c.l.b16 %v79
    %v133 = vunpack.c.h.b16 %v79
    %v134 = vunpack.c.l.b16 %v80
    %v135 = vunpack.c.h.b16 %v80
    %v136 = vunpack.c.l.b16 %v81
    %v137 = vunpack.c.h.b16 %v81
    %v138 = vunpack.c.l.b16 %v82
    %v139 = vunpack.c.h.b16 %v82
    %v140 = vunpack.c.l.b16 %v83
    %v141 = vunpack.c.h.b16 %v83
    %v142 = vunpack.c.l.b16 %v84
    %v143 = vunpack.c.h.b16 %v84
    %v144 = vunpack.c.l.b16 %v85
    %v145 = vunpack.c.h.b16 %v85
    %v146 = vunpack.c.l.b16 %v86
    %v147 = vunpack.c.h.b16 %v86
    %v148 = vunpack.c.l.b16 %v87
    %v149 = vunpack.c.h.b16 %v87
    %v150 = vunpack.c.l.b16 %v88
    %v151 = vunpack.c.h.b16 %v88
    %v152 = vunpack.c.l.b16 %v89
    %v153 = vunpack.c.h.b16 %v89
    %v154 = vunpack.c.l.b16 %v90
    %v155 = vunpack.c.h.b16 %v90
    %v156 = vunpack.c.l.b16 %v91
    %v157 = vunpack.c.h.b16 %v91
    %v158 = vpack.c.b16 %v128, %v126
    %v159 = vpack.c.b16 %v129, %v127
    %v160 = vpack.c.b16 %v132, %v130
    %v161 = vpack.c.b16 %v133, %v131
    %v162 = vpack.c.b16 %v136, %v134
    %v163 = vpack.c.b16 %v137, %v135
    %v164 = vpack.c.b16 %v140, %v138
    %v165 = vpack.c.b16 %v141, %v139
    %v166 = vpack.c.b16 %v144, %v142
    %v167 = vpack.c.b16 %v145, %v143
    %v168 = vpack.c.b16 %v148, %v146
    %v169 = vpack.c.b16 %v149, %v147
    %v170 = vpack.c.b16 %v152, %v150
    %v171 = vpack.c.b16 %v153, %v151
    %v172 = vpack.c.b16 %v156, %v154
    %v173 = vpack.c.b16 %v157, %v155
    %190 = vmatprep.subr.bf16.mxu0 %v173
    %191 = vmatpush1.bf16.msra.mxu0 %v172
    %192 = vmatprep.subr.bf16.mxu0 %v171
    %193 = vmatpush1.bf16.msra.mxu0 %v170
    %194 = vmatprep.subr.bf16.mxu0 %v169
    %195 = vmatpush1.bf16.msra.mxu0 %v168
    %196 = vmatprep.subr.bf16.mxu0 %v167
    %197 = vmatpush1.bf16.msra.mxu0 %v166
    %198 = vmatprep.subr.bf16.mxu0 %v165
    %199 = vmatpush1.bf16.msra.mxu0 %v164
    %200 = vmatprep.subr.bf16.mxu0 %v163
    %201 = vmatpush1.bf16.msra.mxu0 %v162
    %202 = vmatprep.subr.bf16.mxu0 %v161
    %203 = vmatpush1.bf16.msra.mxu0 %v160
    %204 = vmatprep.subr.bf16.mxu0 %v159
    %205 = vmatpush1.bf16.msra.mxu0 %v158
    %206 = vmatprep.subr.bf16.mxu0 0
    %207 = vmatpush2.bf16.msra.mxu0 0
    %208 = vmatprep.subr.bf16.mxu0 0
    %209 = vmatpush2.bf16.msra.mxu0 0
    %210 = vmatprep.subr.bf16.mxu0 0
    %211 = vmatpush2.bf16.msra.mxu0 0
    %212 = vmatprep.subr.bf16.mxu0 0
    %213 = vmatpush2.bf16.msra.mxu0 0
    %214 = vmatprep.subr.bf16.mxu0 0
    %215 = vmatpush2.bf16.msra.mxu0 0
    %216 = vmatprep.subr.bf16.mxu0 0
    %217 = vmatpush2.bf16.msra.mxu0 0
    %218 = vmatprep.subr.bf16.mxu0 0
    %219 = vmatpush2.bf16.msra.mxu0 0
    %220 = vmatprep.subr.bf16.mxu0 0
    %221 = vmatpush2.bf16.msra.mxu0 0
    %222 = vmatprep.mubr.bf16.mxu0 0
    %223 = vmatmul.mubr.bf16.gmra.mxu0 %v108
    %v224 = vpop.f32.mrf.mxu0
    %v225 = vadd.f32 %v97, %v224
    %v226 = vpop.f32.mrf.mxu0
    %v227 = vadd.f32 %v101, %v226
    %v228 = vpop.f32.mrf.mxu0
    %v229 = vadd.f32 %v97, %v228
    %v230 = vpop.f32.mrf.mxu0
    %v231 = vadd.f32 %v101, %v230
    %232 = vdwg.mxu0
    %233 = vst [vmem:[#allocation8] sm:$0xff] %v225
    %234 = vst [vmem:[#allocation8 + $0x8] sm:$0xff] %v227
    %235 = vst [vmem:[#allocation8 + $0x10] sm:$0xff] %v229
    %236 = vst [vmem:[#allocation8 + $0x18] sm:$0xff] %v231
    // Predicated region
    $region26: #{tpu_custom_call.1} parent=1 // pred_check
      _
    $region27: #{tpu_custom_call.1} parent=1 // pred_check_branch
      %238 = sbr.rel (0) target = $region29
    $region28: #{tpu_custom_call.1} parent=1 // pred_region
      %s240 = ssub.s32 512, 512
      %241 = vsyncadd [#allocation5], %s240
      %s242 = sshll.u32 [#allocation8], 4
      %s243 = int_to_ptr.vmem [resolvable:$true] %s242
      %248 = dma.vmem_to_hbm [thread:$0]  %s243, 512, %s3, [#allocation5], 256, 256, 16
    $region29: #{tpu_custom_call.1} parent=1 // pred_fallthru
      _
    // Predicated region
    $region30: #{tpu_custom_call.1} parent=1 // pred_check
      _
    $region31: #{tpu_custom_call.1} parent=1 // pred_check_branch
      %250 = sbr.rel (0) target = $region33
    $region32: #{tpu_custom_call.1} parent=1 // pred_region
      %251 = dma.done [#allocation5], 512
    $region33: #{tpu_custom_call.1} parent=1 // pred_fallthru
      _
    %252 = vsyncpa [#allocation4], 1
    %253 = vsyncpa [#allocation7], 1
    %254 = vsyncpa [#allocation5], 1

</llo_original>
